<compile_context>
chip_gen: v6e
topology: v6e:2x2x1
jax: 0.10.0
libtpu: 0.0.40
codegen_flags: <defaults>
</compile_context>

<pallas_src>
import jax
import jax.numpy as jnp
from jax.experimental import pallas as pl
from jax.experimental.pallas import tpu as pltpu


def _ext_attn_kernel(q_ref, wk_ref, wv_ref, o_ref, acc_ref):
    # q_ref:   (Bblk, L, D)  activations, f32
    # wk_ref:  (D, tS)       mk.weight^T slice, bf16
    # wv_ref:  (tS, D)       mv.weight^T slice, bf16
    # o_ref:   (Bblk, L, D)  output, original dtype
    # acc_ref: (Bblk*L, D)   f32 accumulator across S tiles
    s_idx = pl.program_id(1)

    @pl.when(s_idx == 0)
    def _():
        acc_ref[...] = jnp.zeros_like(acc_ref)

    bblk, seq_len, d_model = q_ref.shape
    m_rows = bblk * seq_len

    # (Bblk, L, D) -> (M, D); bf16 into the MXU, f32 accumulation out.
    q = q_ref[...].reshape(m_rows, d_model).astype(jnp.bfloat16)

    # Logits for this S tile: (M, tS).
    logits = jnp.dot(q, wk_ref[...], preferred_element_type=jnp.float32)

    # Softmax over the sequence axis L (== nn.Softmax(dim=1) on (B, L, S)).
    # Each S column is independent of every other S tile, so a per-tile
    # softmax is exact.  All softmax math stays in f32.
    lg = logits.reshape(bblk, seq_len, -1)
    m = jnp.max(lg, axis=1, keepdims=True)
    e = jnp.exp(lg - m)
    denom = jnp.sum(e, axis=1, keepdims=True)
    p = e * pl.reciprocal(denom, approx=True)            # (Bblk, L, tS) f32

    # out += softmax(logits) @ mv.weight^T[tS, :]   (MXU, bf16 in / f32 acc)
    p2 = p.reshape(m_rows, -1).astype(jnp.bfloat16)
    acc_ref[...] += jnp.dot(p2, wv_ref[...], preferred_element_type=jnp.float32)

    @pl.when(s_idx == pl.num_programs(1) - 1)
    def _():
        o_ref[...] = acc_ref[...].reshape(bblk, seq_len, d_model).astype(o_ref.dtype)


def prepare_external_attn_params(wk, wv, param_dtype=jnp.bfloat16):
    """One-time parameter prep (hoisted out of the per-call path).

    wk: PyTorch mk.weight, shape (S, d_model)
    wv: PyTorch mv.weight, shape (d_model, S)
    Returns (wk_t, wv_t) = (d_model, S), (S, d_model) in `param_dtype`.
    """
    return wk.T.astype(param_dtype), wv.T.astype(param_dtype)


def _pick_b_block(B, L, target_rows=512, min_batch_blocks=2):
    """Largest divisor of B with b_block*L <= target_rows, preferring to keep
    at least `min_batch_blocks` grid steps on the batch axis (megacore)."""
    cap = max(1, target_rows // max(L, 1))
    divs = [d for d in range(1, min(B, cap) + 1) if B % d == 0]
    for d in reversed(divs):
        if B // d >= min_batch_blocks:
            return d
    return divs[-1]


def _pick_s_tile(S, cap=512):
    if S <= cap:
        return S
    # Largest multiple of 128 that divides S and is <= cap.
    for t in range(cap - cap % 128, 0, -128):
        if S % t == 0:
            return t
    return S  # fallback: no S tiling


def temporal_external_attn(queries, wk_t, wv_t, *, b_block=None, s_tile=None):
    """queries: (B, L, D) f32; wk_t: (D, S); wv_t: (S, D) (pre-transposed weights)."""
    B, L, D = queries.shape
    Dw, S = wk_t.shape
    assert Dw == D and wv_t.shape == (S, D)
    assert L % 8 == 0 and D % 128 == 0 and S % 128 == 0, (
        "Block shapes must satisfy the (8, 128) tiling constraint.")

    if b_block is None:
        b_block = _pick_b_block(B, L)
    assert B % b_block == 0

    if s_tile is None:
        s_tile = _pick_s_tile(S)
    assert S % s_tile == 0

    M = b_block * L
    grid = (B // b_block, S // s_tile)

    return pl.pallas_call(
        _ext_attn_kernel,
        out_shape=jax.ShapeDtypeStruct((B, L, D), queries.dtype),
        grid_spec=pltpu.PrefetchScalarGridSpec(
            num_scalar_prefetch=0,
            grid=grid,
            in_specs=[
                pl.BlockSpec((b_block, L, D), lambda b, s: (b, 0, 0)),
                pl.BlockSpec((D, s_tile), lambda b, s: (0, s)),
                pl.BlockSpec((s_tile, D), lambda b, s: (s, 0)),
            ],
            out_specs=pl.BlockSpec((b_block, L, D), lambda b, s: (b, 0, 0)),
            scratch_shapes=[pltpu.VMEM((M, D), jnp.float32)],
        ),
        compiler_params=pltpu.CompilerParams(
            dimension_semantics=("parallel", "arbitrary")),
    )(queries, wk_t, wv_t)


def _reference(queries, wk, wv):
    attn = jnp.einsum("bld,sd->bls", queries, wk)   # mk(queries)
    attn = jax.nn.softmax(attn, axis=1)             # softmax over L (dim=1)
    return jnp.einsum("bls,ds->bld", attn, wv)      # mv(attn)


if __name__ == "__main__":
    # Small, lane-dense shapes consistent with the module (d_model=128, S=256).
    B, L, D, S = 16, 16, 128, 256

    key = jax.random.PRNGKey(0)
    k_q, k_mk, k_mv = jax.random.split(key, 3)

    queries = jax.random.normal(k_q, (B, L, D), dtype=jnp.float32)
    # PyTorch Linear weight shapes: mk.weight (S, D), mv.weight (D, S).
    wk = jax.random.normal(k_mk, (S, D), dtype=jnp.float32) * 0.1
    wv = jax.random.normal(k_mv, (D, S), dtype=jnp.float32) * 0.1

    # One-time weight prep (transpose + bf16 cast) -- not in the per-call path.
    wk_t, wv_t = prepare_external_attn_params(wk, wv)

    ref = _reference(queries, wk, wv)

    # Default path: single S tile (weights grid-invariant, fetched once).
    out = jax.block_until_ready(temporal_external_attn(queries, wk_t, wv_t))
    assert out.shape == (B, L, D)
    # bf16 MXU inputs with f32 accumulation -> relaxed tolerance vs f32 reference.
    assert jnp.allclose(out, ref, atol=2e-2, rtol=2e-2), float(
        jnp.max(jnp.abs(out - ref)))

    # S-tiled path (exercises the VMEM accumulator across the inner grid axis).
    out_tiled = jax.block_until_ready(
        temporal_external_attn(queries, wk_t, wv_t, s_tile=128))
    assert jnp.allclose(out_tiled, ref, atol=2e-2, rtol=2e-2), float(
        jnp.max(jnp.abs(out_tiled - ref)))

    print("KERNEL_OK")
</pallas_src>

<mosaic_0001>
module attributes {stable_mosaic.version = 11 : i64} {
  func.func @_ext_attn_kernel(%arg0: i32, %arg1: i32, %arg2: memref<8x16x128xf32, #tpu.memory_space<vmem>>, %arg3: memref<128x256xbf16, #tpu.memory_space<vmem>>, %arg4: memref<256x128xbf16, #tpu.memory_space<vmem>>, %arg5: memref<8x16x128xf32, #tpu.memory_space<vmem>>, %arg6: memref<128x128xf32, #tpu.memory_space<vmem>>) attributes {dimension_semantics = [#tpu.dimension_semantics<parallel>, #tpu.dimension_semantics<arbitrary>], iteration_bounds = array<i64: 2, 1>, scalar_prefetch = 0 : i64, scratch_operands = 1 : i64, tpu.core_type = #tpu.core_type<tc>, window_params = [{transform_indices = @transform_0, window_bounds = array<i64: 8, 16, 128>}, {transform_indices = @transform_1, window_bounds = array<i64: 128, 256>}, {transform_indices = @transform_2, window_bounds = array<i64: 256, 128>}, {transform_indices = @transform_3, window_bounds = array<i64: 8, 16, 128>}]} {
    %c0_i32 = arith.constant 0 : i32
    %0 = arith.cmpi eq, %arg1, %c0_i32 : i32
    %1 = arith.extui %0 : i1 to i32
    %c0_i32_0 = arith.constant 0 : i32
    %2 = arith.cmpi ne, %1, %c0_i32_0 : i32
    scf.if %2 {
      %cst_16 = arith.constant 0.000000e+00 : f32
      %29 = vector.broadcast %cst_16 : f32 to vector<128x128xf32>
      %c0_17 = arith.constant 0 : index
      %c0_18 = arith.constant 0 : index
      %30 = vector.load %arg6[%c0_17, %c0_18] : memref<128x128xf32, #tpu.memory_space<vmem>>, vector<128x128xf32>
      tpu.vector_store %arg6[%c0_17, %c0_18], %29 {strides = array<i32>} : memref<128x128xf32, #tpu.memory_space<vmem>>, vector<128x128xf32>,
    } else {
    }
    %c0 = arith.constant 0 : index
    %c0_1 = arith.constant 0 : index
    %c0_2 = arith.constant 0 : index
    %3 = vector.load %arg2[%c0, %c0_1, %c0_2] : memref<8x16x128xf32, #tpu.memory_space<vmem>>, vector<8x16x128xf32>
    %4 = vector.shape_cast %3 : vector<8x16x128xf32> to vector<128x128xf32>
    %5 = arith.truncf %4 : vector<128x128xf32> to vector<128x128xbf16>
    %c0_3 = arith.constant 0 : index
    %c0_4 = arith.constant 0 : index
    %6 = vector.load %arg3[%c0_3, %c0_4] : memref<128x256xbf16, #tpu.memory_space<vmem>>, vector<128x256xbf16>
    %cst = arith.constant dense<0.000000e+00> : vector<128x256xf32>
    %7 = tpu.matmul %5, %6, %cst {dimension_numbers = #tpu.dot_dimension_numbers<[1], [0], [0], [1], [0, 0, 1, 1], [], []>} : vector<128x128xbf16>, vector<128x256xbf16>, vector<128x256xf32> -> vector<128x256xf32>
    %8 = vector.shape_cast %7 : vector<128x256xf32> to vector<8x16x256xf32>
    %cst_5 = arith.constant dense<0xFF800000> : vector<8x256xf32>
    %9 = vector.multi_reduction <maximumf>, %8, %cst_5 [1] : vector<8x16x256xf32> to vector<8x256xf32>
    %10 = vector.shape_cast %9 : vector<8x256xf32> to vector<8x1x256xf32>
    %11 = vector.broadcast %10 : vector<8x1x256xf32> to vector<8x16x256xf32>
    %12 = arith.subf %8, %11 : vector<8x16x256xf32>
    %13 = math.exp %12 : vector<8x16x256xf32>
    %cst_6 = arith.constant dense<0.000000e+00> : vector<8x256xf32>
    %14 = vector.multi_reduction <add>, %13, %cst_6 [1] : vector<8x16x256xf32> to vector<8x256xf32>
    %15 = vector.shape_cast %14 : vector<8x256xf32> to vector<8x1x256xf32>
    %16 = tpu.reciprocal %15 {approx = true} : vector<8x1x256xf32> -> vector<8x1x256xf32>
    %17 = vector.broadcast %16 : vector<8x1x256xf32> to vector<8x16x256xf32>
    %18 = arith.mulf %13, %17 : vector<8x16x256xf32>
    %19 = vector.shape_cast %18 : vector<8x16x256xf32> to vector<128x256xf32>
    %20 = arith.truncf %19 : vector<128x256xf32> to vector<128x256xbf16>
    %c0_7 = arith.constant 0 : index
    %c0_8 = arith.constant 0 : index
    %21 = vector.load %arg6[%c0_7, %c0_8] : memref<128x128xf32, #tpu.memory_space<vmem>>, vector<128x128xf32>
    %c0_9 = arith.constant 0 : index
    %c0_10 = arith.constant 0 : index
    %22 = vector.load %arg4[%c0_9, %c0_10] : memref<256x128xbf16, #tpu.memory_space<vmem>>, vector<256x128xbf16>
    %cst_11 = arith.constant dense<0.000000e+00> : vector<128x128xf32>
    %23 = tpu.matmul %20, %22, %cst_11 {dimension_numbers = #tpu.dot_dimension_numbers<[1], [0], [0], [1], [0, 0, 1, 1], [], []>} : vector<128x256xbf16>, vector<256x128xbf16>, vector<128x128xf32> -> vector<128x128xf32>
    %24 = arith.addf %21, %23 : vector<128x128xf32>
    %c0_12 = arith.constant 0 : index
    %c0_13 = arith.constant 0 : index
    %25 = vector.load %arg6[%c0_12, %c0_13] : memref<128x128xf32, #tpu.memory_space<vmem>>, vector<128x128xf32>
    tpu.vector_store %arg6[%c0_12, %c0_13], %24 {strides = array<i32>} : memref<128x128xf32, #tpu.memory_space<vmem>>, vector<128x128xf32>,
    %c0_i32_14 = arith.constant 0 : i32
    %26 = arith.cmpi eq, %arg1, %c0_i32_14 : i32
    %27 = arith.extui %26 : i1 to i32
    %c0_i32_15 = arith.constant 0 : i32
    %28 = arith.cmpi ne, %27, %c0_i32_15 : i32
    scf.if %28 {
      %c0_16 = arith.constant 0 : index
      %c0_17 = arith.constant 0 : index
      %29 = vector.load %arg6[%c0_16, %c0_17] : memref<128x128xf32, #tpu.memory_space<vmem>>, vector<128x128xf32>
      %30 = vector.shape_cast %29 : vector<128x128xf32> to vector<8x16x128xf32>
      %c0_18 = arith.constant 0 : index
      %c0_19 = arith.constant 0 : index
      %c0_20 = arith.constant 0 : index
      %31 = vector.load %arg5[%c0_18, %c0_19, %c0_20] : memref<8x16x128xf32, #tpu.memory_space<vmem>>, vector<8x16x128xf32>
      tpu.vector_store %arg5[%c0_18, %c0_19, %c0_20], %30 {strides = array<i32>} : memref<8x16x128xf32, #tpu.memory_space<vmem>>, vector<8x16x128xf32>,
    } else {
    }
    return
  }
  func.func @transform_0(%arg0: i32, %arg1: i32) -> (i32, i32, i32) {
    %c0_i32 = arith.constant 0 : i32
    %c0_i32_0 = arith.constant 0 : i32
    %c0_i32_1 = arith.constant 0 : i32
    return %arg0, %c0_i32, %c0_i32_0 : i32, i32, i32
  }
  func.func @transform_1(%arg0: i32, %arg1: i32) -> (i32, i32) {
    %c0_i32 = arith.constant 0 : i32
    %c0_i32_0 = arith.constant 0 : i32
    return %c0_i32, %arg1 : i32, i32
  }
  func.func @transform_2(%arg0: i32, %arg1: i32) -> (i32, i32) {
    %c0_i32 = arith.constant 0 : i32
    %c0_i32_0 = arith.constant 0 : i32
    return %arg1, %c0_i32 : i32, i32
  }
  func.func @transform_3(%arg0: i32, %arg1: i32) -> (i32, i32, i32) {
    %c0_i32 = arith.constant 0 : i32
    %c0_i32_0 = arith.constant 0 : i32
    %c0_i32_1 = arith.constant 0 : i32
    return %arg0, %c0_i32, %c0_i32_0 : i32, i32, i32
  }
}

</mosaic_0001>

<llo_original>
// kernel: tpu_custom_call.1
$region0: #{tpu_custom_call.1}
  #allocation0 [shape = 'u32[]', space=smem, size = 0x4, offset = 0x4, fixed_abs, tag = 'smem constant byte address 0x4 - core index']
  #allocation1 [shape = 'u32[144,128]{1,0:T(1,128)}', space=vmem, size = 0x12000, scoped, tag = 'internal scratch']
  #allocation2 [shape = 'f32[128,128]{1,0:T(8,128)}', space=vmem, size = 0x10000, scoped, tag = 'scratch operand']
  %s0 = inlined_call_operand.hbm [shape: f32[16,16,128], index: 0, kind: input, shape index: {}]
  %s1 = inlined_call_operand.hbm [shape: bf16[128,256], index: 1, kind: input, shape index: {}]
  %s2 = inlined_call_operand.hbm [shape: bf16[256,128], index: 2, kind: input, shape index: {}]
  %s3 = inlined_call_operand.hbm [shape: f32[16,16,128], index: 3, kind: output, shape index: {}]
  %s4 = sld [smem:[#allocation0]]
  $region65: #{tpu_custom_call.1} parent=0
    _
  %s6 = ssub.s32 1, %s4
  %s7 = scalar_select 0, %s6, %s4
  $region1: #{tpu_custom_call.1} parent=0
    #allocation3 [shape = 'u8[131072]{0}', space=vmem, size = 0x20000, scoped, tag = 'input window, operand 0']
    #allocation4 [shape = 's32[2]{0}', space=sflag, size = 0x8, scoped, tag = 'scoped memory for tpu_custom_call.1']
    #allocation5 [shape = 's32[2]{0}', space=sflag, size = 0x8, scoped, tag = 'scoped memory for tpu_custom_call.1']
    #allocation6 [shape = 'u8[65536]{0}', space=vmem, size = 0x10000, scoped, tag = 'input window, operand 1, single buffered']
    #allocation7 [shape = 's32[1]{0}', space=sflag, size = 0x4, scoped, tag = 'scoped memory for tpu_custom_call.1']
    #allocation8 [shape = 'u8[65536]{0}', space=vmem, size = 0x10000, scoped, tag = 'input window, operand 2, single buffered']
    #allocation9 [shape = 'u8[131072]{0}', space=vmem, size = 0x20000, scoped, tag = 'output window, operand 0']
    %8 = vsyncpa [#allocation4], 0
    %s9 = scalar_lea.sflag [#allocation4], 1
    %10 = vsyncpa %s9, 0
    %11 = vsyncpa [#allocation7], 0
    %12 = vsyncpa [#allocation5], 0
    %s13 = scalar_lea.sflag [#allocation5], 1
    %14 = vsyncpa %s13, 0
    loop: start=0, step=1, limit=4
    $region2: #{tpu_custom_call.1} parent=1 // loop_pre_header
      _
    $region3: #{tpu_custom_call.1} parent=1 // loop_header
      %s16 = sphi 0, %s20
      %p17 = scmp.ge.s32.totalorder %s16, 4
      %s23 = sphi 0, %s35
      %s24 = sphi 0, %s31
      %s25 = sphi 0, %s23
      %s26 = sphi 0, %s24
      %s27 = sphi 0, %s25
      %s28 = sphi 0, %s26
      %s38 = sphi 0, %s40
      %s41 = sphi 0, %s38
      %s42 = sphi 0, %s41
      %s58 = sphi 0, %s42
      %s64 = sphi 0, %s66
      %s67 = sphi 0, %s64
      %s68 = sphi 0, %s67
      %s84 = sphi 0, %s68
      %s90 = sphi 0, %s92
      %s93 = sphi 0, %s90
      %s94 = sphi 0, %s93
      %s110 = sphi 0, %s94
      %s116 = sphi 0, %s118
      %s119 = sphi 0, %s116
      %s120 = sphi 0, %s119
      %s136 = sphi 0, %s120
    $region4: #{tpu_custom_call.1} parent=1 // loop_header_branch
      %19 = sbr.rel (%p17) target = $region8
    $region5: #{tpu_custom_call.1} parent=1 // loop_body
      %s21 = ssub.s32 %s16, 1
      %s22 = ssub.s32 %s16, 2
      %s29 = sadd.s32 1, %s24
      %p30 = scmp.ge.s32.totalorder %s29, 1
      %s31 = scalar_select %p30, 0, %s29
      %s32 = sadd.s32 1, %s23
      %s33 = scalar_select %p30, %s32, %s23
      %p34 = scmp.ge.s32.totalorder %s33, 2
      %s35 = scalar_select %p34, 0, %s33
      %s36 = ssub.s32 %s23, %s35
      %p37 = scmp.eq.s32.totalorder %s36, 0
      %s39 = sadd.s32 %s38, 1
      %s40 = scalar_select %p37, %s38, %s39
      %p43 = pneg %p37
      %p44 = scmp.eq.s32.totalorder %s16, 1
      %p45 = por %p43, %p44
      %p46 = scmp.ne.s32.totalorder %s38, %s41
      %p47 = scmp.eq.s32.totalorder %s16, 0
      %p48 = por %p46, %p47
      %p49 = scmp.ne.s32.totalorder %s38, %s41
      %p50 = scmp.eq.s32.totalorder %s21, 1
      %p51 = por %p49, %p50
      %p52 = scmp.ne.s32.totalorder %s41, %s42
      %p53 = scmp.eq.s32.totalorder %s21, 0
      %p54 = por %p52, %p53
      %p55 = scmp.ne.s32.totalorder %s41, %s42
      %p56 = scmp.eq.s32.totalorder %s22, 1
      %p57 = por %p55, %p56
      %p59 = scmp.ne.s32.totalorder %s42, %s58
      %p60 = scmp.eq.s32.totalorder %s22, 0
      %p61 = por %p59, %p60
      %s62 = ssub.s32 %s24, %s31
      %p63 = scmp.eq.s32.totalorder %s62, 0
      %s65 = sadd.s32 %s64, 1
      %s66 = scalar_select %p63, %s64, %s65
      %p69 = pneg %p63
      %p70 = scmp.eq.s32.totalorder %s16, 1
      %p71 = por %p69, %p70
      %p72 = scmp.ne.s32.totalorder %s64, %s67
      %p73 = scmp.eq.s32.totalorder %s16, 0
      %p74 = por %p72, %p73
      %p75 = scmp.ne.s32.totalorder %s64, %s67
      %p76 = scmp.eq.s32.totalorder %s21, 1
      %p77 = por %p75, %p76
      %p78 = scmp.ne.s32.totalorder %s67, %s68
      %p79 = scmp.eq.s32.totalorder %s21, 0
      %p80 = por %p78, %p79
      %p81 = scmp.ne.s32.totalorder %s67, %s68
      %p82 = scmp.eq.s32.totalorder %s22, 1
      %p83 = por %p81, %p82
      %p85 = scmp.ne.s32.totalorder %s68, %s84
      %p86 = scmp.eq.s32.totalorder %s22, 0
      %p87 = por %p85, %p86
      %s88 = ssub.s32 %s24, %s31
      %p89 = scmp.eq.s32.totalorder %s88, 0
      %s91 = sadd.s32 %s90, 1
      %s92 = scalar_select %p89, %s90, %s91
      %p95 = pneg %p89
      %p96 = scmp.eq.s32.totalorder %s16, 1
      %p97 = por %p95, %p96
      %p98 = scmp.ne.s32.totalorder %s90, %s93
      %p99 = scmp.eq.s32.totalorder %s16, 0
      %p100 = por %p98, %p99
      %p101 = scmp.ne.s32.totalorder %s90, %s93
      %p102 = scmp.eq.s32.totalorder %s21, 1
      %p103 = por %p101, %p102
      %p104 = scmp.ne.s32.totalorder %s93, %s94
      %p105 = scmp.eq.s32.totalorder %s21, 0
      %p106 = por %p104, %p105
      %p107 = scmp.ne.s32.totalorder %s93, %s94
      %p108 = scmp.eq.s32.totalorder %s22, 1
      %p109 = por %p107, %p108
      %p111 = scmp.ne.s32.totalorder %s94, %s110
      %p112 = scmp.eq.s32.totalorder %s22, 0
      %p113 = por %p111, %p112
      %s114 = ssub.s32 %s23, %s35
      %p115 = scmp.eq.s32.totalorder %s114, 0
      %s117 = sadd.s32 %s116, 1
      %s118 = scalar_select %p115, %s116, %s117
      %p121 = pneg %p115
      %p122 = scmp.eq.s32.totalorder %s16, 1
      %p123 = por %p121, %p122
      %p124 = scmp.ne.s32.totalorder %s116, %s119
      %p125 = scmp.eq.s32.totalorder %s16, 0
      %p126 = por %p124, %p125
      %p127 = scmp.ne.s32.totalorder %s116, %s119
      %p128 = scmp.eq.s32.totalorder %s21, 1
      %p129 = por %p127, %p128
      %p130 = scmp.ne.s32.totalorder %s119, %s120
      %p131 = scmp.eq.s32.totalorder %s21, 0
      %p132 = por %p130, %p131
      %p133 = scmp.ne.s32.totalorder %s119, %s120
      %p134 = scmp.eq.s32.totalorder %s22, 1
      %p135 = por %p133, %p134
      %p137 = scmp.ne.s32.totalorder %s120, %s136
      %p138 = scmp.eq.s32.totalorder %s22, 0
      %p139 = por %p137, %p138
      %p140 = scmp.le.s32.totalorder 1, %s16
      %p141 = scmp.lt.s32.totalorder %s16, 3
      %p142 = pnand %p140, %p141
      %p143 = pneg %p142
      // Predicated region
      $region9: #{tpu_custom_call.1} parent=5 // pred_check
        _
      $region10: #{tpu_custom_call.1} parent=5 // pred_check_branch
        %145 = sbr.rel (%p142) target = $region12
      $region11: #{tpu_custom_call.1} parent=5 // pred_region
        %s146 = ssub.s32 %s16, 1
        // Predicated region
        $region13: #{tpu_custom_call.1} parent=11 // pred_check
          %p147 = pneg %p80
        $region14: #{tpu_custom_call.1} parent=11 // pred_check_branch
          %149 = sbr.rel (%p147) target = $region16
        $region15: #{tpu_custom_call.1} parent=11 // pred_region
          %s150 = smul.u32 2, %s26
          %s152 = ssub.s32 2048, 2048
          %153 = vsyncadd [#allocation7], %s152
          %s154 = smul.addr %s150, 64
          %s155 = scalar_lea.hbm %s1, %s154
          %s156 = sshll.u32 [#allocation6], 4
          %s157 = int_to_ptr.vmem [resolvable:$true] %s156
          %162 = dma.hbm_to_vmem [thread:$0]  %s155, 2048, %s157, [#allocation7], 128, 128, 8
        $region16: #{tpu_custom_call.1} parent=11 // pred_fallthru
          _
        // Predicated region
        $region17: #{tpu_custom_call.1} parent=11 // pred_check
          %p163 = pneg %p106
        $region18: #{tpu_custom_call.1} parent=11 // pred_check_branch
          %165 = sbr.rel (%p163) target = $region20
        $region19: #{tpu_custom_call.1} parent=11 // pred_region
          %s166 = smul.u32 32, %s26
          %s168 = ssub.s32 2048, 2048
          %169 = vsyncadd [#allocation7], %s168
          %s170 = smul.addr %s166, 64
          %s171 = scalar_lea.hbm %s2, %s170
          %s172 = sshll.u32 [#allocation8], 4
          %s173 = int_to_ptr.vmem [resolvable:$true] %s172
          %178 = dma.hbm_to_vmem [thread:$0]  %s171, 2048, %s173, [#allocation7], 64, 64, 4
        $region20: #{tpu_custom_call.1} parent=11 // pred_fallthru
          _
      $region12: #{tpu_custom_call.1} parent=5 // pred_fallthru
        _
      %p179 = scmp.lt.s32.totalorder %s16, 2
      // Predicated region
      $region21: #{tpu_custom_call.1} parent=5 // pred_check
        %p180 = pneg %p179
      $region22: #{tpu_custom_call.1} parent=5 // pred_check_branch
        %182 = sbr.rel (%p180) target = $region24
      $region23: #{tpu_custom_call.1} parent=5 // pred_region
        // Predicated region
        $region25: #{tpu_custom_call.1} parent=23 // pred_check
          %p183 = pneg %p48
        $region26: #{tpu_custom_call.1} parent=23 // pred_check_branch
          %185 = sbr.rel (%p183) target = $region28
        $region27: #{tpu_custom_call.1} parent=23 // pred_region
          %s186 = sand.u32 %s38, 1
          %s187 = scalar_lea.sflag [#allocation4], %s186
          %s188 = sand.u32 %s38, 1
          %s189 = smul.addr %s188, 128
          %s190 = scalar_lea.vmem [#allocation3], %s189
          %s191 = smul.u32 8, %s23
          %s193 = ssub.s32 2048, 2048
          %194 = vsyncadd %s187, %s193
          %s195 = smul.addr %s191, 2
          %s196 = smul.addr %s195, 128
          %s197 = scalar_lea.hbm %s0, %s196
          %s198 = sshll.u32 %s190, 4
          %s199 = int_to_ptr.vmem [resolvable:$true] %s198
          %204 = dma.hbm_to_vmem [thread:$0]  %s197, 2048, %s199, %s187, 128, 128, 8
        $region28: #{tpu_custom_call.1} parent=23 // pred_fallthru
          _
      $region24: #{tpu_custom_call.1} parent=5 // pred_fallthru
        _
      %p205 = scmp.le.s32.totalorder 1, %s16
      %p206 = scmp.lt.s32.totalorder %s16, 3
      %p207 = pnand %p205, %p206
      %p208 = pneg %p207
      // Predicated region
      $region29: #{tpu_custom_call.1} parent=5 // pred_check
        _
      $region30: #{tpu_custom_call.1} parent=5 // pred_check_branch
        %210 = sbr.rel (%p207) target = $region32
      $region31: #{tpu_custom_call.1} parent=5 // pred_region
        %s211 = ssub.s32 %s16, 1
        %s212 = sand.u32 %s41, 1
        %s213 = scalar_lea.sflag [#allocation4], %s212
        %s214 = sand.u32 %s41, 1
        %s215 = smul.addr %s214, 128
        %s216 = scalar_lea.vmem [#allocation3], %s215
        // Predicated region
        $region33: #{tpu_custom_call.1} parent=31 // pred_check
          %p217 = pneg %p54
        $region34: #{tpu_custom_call.1} parent=31 // pred_check_branch
          %219 = sbr.rel (%p217) target = $region36
        $region35: #{tpu_custom_call.1} parent=31 // pred_region
          %220 = dma.done %s213, 2048
        $region36: #{tpu_custom_call.1} parent=31 // pred_fallthru
          _
        // Predicated region
        $region37: #{tpu_custom_call.1} parent=31 // pred_check
          %p221 = pneg %p80
        $region38: #{tpu_custom_call.1} parent=31 // pred_check_branch
          %223 = sbr.rel (%p221) target = $region40
        $region39: #{tpu_custom_call.1} parent=31 // pred_region
          %224 = dma.done [#allocation7], 2048
        $region40: #{tpu_custom_call.1} parent=31 // pred_fallthru
          _
        // Predicated region
        $region41: #{tpu_custom_call.1} parent=31 // pred_check
          %p225 = pneg %p106
        $region42: #{tpu_custom_call.1} parent=31 // pred_check_branch
          %227 = sbr.rel (%p225) target = $region44
        $region43: #{tpu_custom_call.1} parent=31 // pred_region
          %228 = dma.done [#allocation7], 2048
        $region44: #{tpu_custom_call.1} parent=31 // pred_fallthru
          _
        %s229 = sand.u32 %s41, 1
        %s230 = scalar_lea.sflag [#allocation4], %s229
        %s231 = sand.u32 %s41, 1
        %s232 = smul.addr %s231, 128
        %s233 = scalar_lea.vmem [#allocation3], %s232
        %p234 = pneg %p54
        %p235 = pneg %p51
        %p236 = pneg %p80
        %p237 = pneg %p77
        %p238 = pneg %p106
        %p239 = pneg %p103
        %p240 = pneg %p132
        %p241 = pneg %p129
        %s242 = sand.u32 %s119, 1
        %s243 = scalar_lea.sflag [#allocation5], %s242
        %s244 = sand.u32 %s119, 1
        %s245 = smul.addr %s244, 128
        %s246 = scalar_lea.vmem [#allocation9], %s245
        %s247 = smul.u32 8, %s25
        %s248 = smul.u32 2, %s26
        %s249 = smul.u32 32, %s26
        %s250 = smul.u32 8, %s25
        %p252 = scmp.eq.s32.totalorder %s26, 0
        // Predicated region
        $region45: #{tpu_custom_call.1} parent=31 // pred_check
          %p253 = pneg %p252
        $region46: #{tpu_custom_call.1} parent=31 // pred_check_branch
          %255 = sbr.rel (%p253) target = $region48
        $region47: #{tpu_custom_call.1} parent=31 // pred_region
          %256 = vst [vmem:[#allocation2] sm:$0xff] 0.0
          %257 = vst [vmem:[#allocation2 + $0x8] sm:$0xff] 0.0
          %258 = vst [vmem:[#allocation2 + $0x10] sm:$0xff] 0.0
          %259 = vst [vmem:[#allocation2 + $0x18] sm:$0xff] 0.0
          %260 = vst [vmem:[#allocation2 + $0x20] sm:$0xff] 0.0
          %261 = vst [vmem:[#allocation2 + $0x28] sm:$0xff] 0.0
          %262 = vst [vmem:[#allocation2 + $0x30] sm:$0xff] 0.0
          %263 = vst [vmem:[#allocation2 + $0x38] sm:$0xff] 0.0
          %264 = vst [vmem:[#allocation2 + $0x40] sm:$0xff] 0.0
          %265 = vst [vmem:[#allocation2 + $0x48] sm:$0xff] 0.0
          %266 = vst [vmem:[#allocation2 + $0x50] sm:$0xff] 0.0
          %267 = vst [vmem:[#allocation2 + $0x58] sm:$0xff] 0.0
          %268 = vst [vmem:[#allocation2 + $0x60] sm:$0xff] 0.0
          %269 = vst [vmem:[#allocation2 + $0x68] sm:$0xff] 0.0
          %270 = vst [vmem:[#allocation2 + $0x70] sm:$0xff] 0.0
          %271 = vst [vmem:[#allocation2 + $0x78] sm:$0xff] 0.0
        $region48: #{tpu_custom_call.1} parent=31 // pred_fallthru
          _
        %v272 = vld [vmem:[%s216] sm:$0xff]
        %v273 = vld [vmem:[%s216 + $0x8] sm:$0xff]
        %v274 = vld [vmem:[%s216 + $0x10] sm:$0xff]
        %v275 = vld [vmem:[%s216 + $0x18] sm:$0xff]
        %v276 = vld [vmem:[%s216 + $0x20] sm:$0xff]
        %v277 = vld [vmem:[%s216 + $0x28] sm:$0xff]
        %v278 = vld [vmem:[%s216 + $0x30] sm:$0xff]
        %v279 = vld [vmem:[%s216 + $0x38] sm:$0xff]
        %v280 = vld [vmem:[%s216 + $0x40] sm:$0xff]
        %v281 = vld [vmem:[%s216 + $0x48] sm:$0xff]
        %v282 = vld [vmem:[%s216 + $0x50] sm:$0xff]
        %v283 = vld [vmem:[%s216 + $0x58] sm:$0xff]
        %v284 = vld [vmem:[%s216 + $0x60] sm:$0xff]
        %v285 = vld [vmem:[%s216 + $0x68] sm:$0xff]
        %v286 = vld [vmem:[%s216 + $0x70] sm:$0xff]
        %v287 = vld [vmem:[%s216 + $0x78] sm:$0xff]
        %v288 = vpack.c.bf16 %v273, %v272
        %v289 = vpack.c.bf16 %v275, %v274
        %v290 = vpack.c.bf16 %v277, %v276
        %v291 = vpack.c.bf16 %v279, %v278
        %v292 = vpack.c.bf16 %v281, %v280
        %v293 = vpack.c.bf16 %v283, %v282
        %v294 = vpack.c.bf16 %v285, %v284
        %v295 = vpack.c.bf16 %v287, %v286
        %v296 = vld [vmem:[#allocation6] sm:$0xff]
        %v297 = vld [vmem:[#allocation6 + $0x8] sm:$0xff]
        %v298 = vld [vmem:[#allocation6 + $0x10] sm:$0xff]
        %v299 = vld [vmem:[#allocation6 + $0x18] sm:$0xff]
        %v300 = vld [vmem:[#allocation6 + $0x20] sm:$0xff]
        %v301 = vld [vmem:[#allocation6 + $0x28] sm:$0xff]
        %v302 = vld [vmem:[#allocation6 + $0x30] sm:$0xff]
        %v303 = vld [vmem:[#allocation6 + $0x38] sm:$0xff]
        %v304 = vld [vmem:[#allocation6 + $0x40] sm:$0xff]
        %v305 = vld [vmem:[#allocation6 + $0x48] sm:$0xff]
        %v306 = vld [vmem:[#allocation6 + $0x50] sm:$0xff]
        %v307 = vld [vmem:[#allocation6 + $0x58] sm:$0xff]
        %v308 = vld [vmem:[#allocation6 + $0x60] sm:$0xff]
        %v309 = vld [vmem:[#allocation6 + $0x68] sm:$0xff]
        %v310 = vld [vmem:[#allocation6 + $0x70] sm:$0xff]
        %v311 = vld [vmem:[#allocation6 + $0x78] sm:$0xff]
        %v328 = vunpack.c.l.b16 %v296
        %v329 = vunpack.c.h.b16 %v296
        %v330 = vunpack.c.l.b16 %v297
        %v331 = vunpack.c.h.b16 %v297
        %v332 = vunpack.c.l.b16 %v298
        %v333 = vunpack.c.h.b16 %v298
        %v334 = vunpack.c.l.b16 %v299
        %v335 = vunpack.c.h.b16 %v299
        %v336 = vunpack.c.l.b16 %v300
        %v337 = vunpack.c.h.b16 %v300
        %v338 = vunpack.c.l.b16 %v301
        %v339 = vunpack.c.h.b16 %v301
        %v340 = vunpack.c.l.b16 %v302
        %v341 = vunpack.c.h.b16 %v302
        %v342 = vunpack.c.l.b16 %v303
        %v343 = vunpack.c.h.b16 %v303
        %v344 = vunpack.c.l.b16 %v304
        %v345 = vunpack.c.h.b16 %v304
        %v346 = vunpack.c.l.b16 %v305
        %v347 = vunpack.c.h.b16 %v305
        %v348 = vunpack.c.l.b16 %v306
        %v349 = vunpack.c.h.b16 %v306
        %v350 = vunpack.c.l.b16 %v307
        %v351 = vunpack.c.h.b16 %v307
        %v352 = vunpack.c.l.b16 %v308
        %v353 = vunpack.c.h.b16 %v308
        %v354 = vunpack.c.l.b16 %v309
        %v355 = vunpack.c.h.b16 %v309
        %v356 = vunpack.c.l.b16 %v310
        %v357 = vunpack.c.h.b16 %v310
        %v358 = vunpack.c.l.b16 %v311
        %v359 = vunpack.c.h.b16 %v311
        %v360 = vpack.c.b16 %v330, %v328
        %v361 = vpack.c.b16 %v331, %v329
        %v362 = vpack.c.b16 %v334, %v332
        %v363 = vpack.c.b16 %v335, %v333
        %v364 = vpack.c.b16 %v338, %v336
        %v365 = vpack.c.b16 %v339, %v337
        %v366 = vpack.c.b16 %v342, %v340
        %v367 = vpack.c.b16 %v343, %v341
        %v368 = vpack.c.b16 %v346, %v344
        %v369 = vpack.c.b16 %v347, %v345
        %v370 = vpack.c.b16 %v350, %v348
        %v371 = vpack.c.b16 %v351, %v349
        %v372 = vpack.c.b16 %v354, %v352
        %v373 = vpack.c.b16 %v355, %v353
        %v374 = vpack.c.b16 %v358, %v356
        %v375 = vpack.c.b16 %v359, %v357
        %392 = vmatprep.subr.bf16.mxu0 %v375
        %393 = vmatpush1.bf16.msra.mxu0 %v374
        %394 = vmatprep.subr.bf16.mxu0 %v373
        %395 = vmatpush1.bf16.msra.mxu0 %v372
        %396 = vmatprep.subr.bf16.mxu0 %v371
        %397 = vmatpush1.bf16.msra.mxu0 %v370
        %398 = vmatprep.subr.bf16.mxu0 %v369
        %399 = vmatpush1.bf16.msra.mxu0 %v368
        %400 = vmatprep.subr.bf16.mxu0 %v367
        %401 = vmatpush1.bf16.msra.mxu0 %v366
        %402 = vmatprep.subr.bf16.mxu0 %v365
        %403 = vmatpush1.bf16.msra.mxu0 %v364
        %404 = vmatprep.subr.bf16.mxu0 %v363
        %405 = vmatpush1.bf16.msra.mxu0 %v362
        %406 = vmatprep.subr.bf16.mxu0 %v361
        %407 = vmatpush1.bf16.msra.mxu0 %v360
        %408 = vmatprep.subr.bf16.mxu0 0
        %409 = vmatpush2.bf16.msra.mxu0 0
        %410 = vmatprep.subr.bf16.mxu0 0
        %411 = vmatpush2.bf16.msra.mxu0 0
        %412 = vmatprep.subr.bf16.mxu0 0
        %413 = vmatpush2.bf16.msra.mxu0 0
        %414 = vmatprep.subr.bf16.mxu0 0
        %415 = vmatpush2.bf16.msra.mxu0 0
        %416 = vmatprep.subr.bf16.mxu0 0
        %417 = vmatpush2.bf16.msra.mxu0 0
        %418 = vmatprep.subr.bf16.mxu0 0
        %419 = vmatpush2.bf16.msra.mxu0 0
        %420 = vmatprep.subr.bf16.mxu0 0
        %421 = vmatpush2.bf16.msra.mxu0 0
        %422 = vmatprep.subr.bf16.mxu0 0
        %423 = vmatpush2.bf16.msra.mxu0 0
        %424 = vmatprep.mubr.bf16.mxu0 0
        %425 = vmatmul.mubr.bf16.gmra.mxu0 %v288
        %v426 = vpop.f32.mrf.mxu0
        %v427 = vadd.f32 0.0, %v426
        %v428 = vpop.f32.mrf.mxu0
        %v429 = vadd.f32 0.0, %v428
        %v430 = vpop.f32.mrf.mxu0
        %v431 = vadd.f32 0.0, %v430
        %v432 = vpop.f32.mrf.mxu0
        %v433 = vadd.f32 0.0, %v432
        %434 = vmatprep.mubr.bf16.mxu0 0
        %435 = vmatmul.mubr.bf16.gmra.mxu0 %v289
        %v436 = vpop.f32.mrf.mxu0
        %v437 = vadd.f32 0.0, %v436
        %v438 = vpop.f32.mrf.mxu0
        %v439 = vadd.f32 0.0, %v438
        %v440 = vpop.f32.mrf.mxu0
        %v441 = vadd.f32 0.0, %v440
        %v442 = vpop.f32.mrf.mxu0
        %v443 = vadd.f32 0.0, %v442
        %444 = vmatprep.mubr.bf16.mxu0 0
        %445 = vmatmul.mubr.bf16.gmra.mxu0 %v290
        %v446 = vpop.f32.mrf.mxu0
        %v447 = vadd.f32 0.0, %v446
        %v448 = vpop.f32.mrf.mxu0
        %v449 = vadd.f32 0.0, %v448
        %v450 = vpop.f32.mrf.mxu0
        %v451 = vadd.f32 0.0, %v450
        %v452 = vpop.f32.mrf.mxu0
        %v453 = vadd.f32 0.0, %v452
        %454 = vmatprep.mubr.bf16.mxu0 0
        %455 = vmatmul.mubr.bf16.gmra.mxu0 %v291
        %v456 = vpop.f32.mrf.mxu0
        %v457 = vadd.f32 0.0, %v456
        %v458 = vpop.f32.mrf.mxu0
        %v459 = vadd.f32 0.0, %v458
        %v460 = vpop.f32.mrf.mxu0
        %v461 = vadd.f32 0.0, %v460
        %v462 = vpop.f32.mrf.mxu0
        %v463 = vadd.f32 0.0, %v462
        %464 = vmatprep.mubr.bf16.mxu0 0
        %465 = vmatmul.mubr.bf16.gmra.mxu0 %v292
        %v466 = vpop.f32.mrf.mxu0
        %v467 = vadd.f32 0.0, %v466
        %v468 = vpop.f32.mrf.mxu0
        %v469 = vadd.f32 0.0, %v468
        %v470 = vpop.f32.mrf.mxu0
        %v471 = vadd.f32 0.0, %v470
        %v472 = vpop.f32.mrf.mxu0
        %v473 = vadd.f32 0.0, %v472
        %474 = vmatprep.mubr.bf16.mxu0 0
        %475 = vmatmul.mubr.bf16.gmra.mxu0 %v293
        %v476 = vpop.f32.mrf.mxu0
        %v477 = vadd.f32 0.0, %v476
        %v478 = vpop.f32.mrf.mxu0
        %v479 = vadd.f32 0.0, %v478
        %v480 = vpop.f32.mrf.mxu0
        %v481 = vadd.f32 0.0, %v480
        %v482 = vpop.f32.mrf.mxu0
        %v483 = vadd.f32 0.0, %v482
        %484 = vmatprep.mubr.bf16.mxu0 0
        %485 = vmatmul.mubr.bf16.gmra.mxu0 %v294
        %v486 = vpop.f32.mrf.mxu0
        %v487 = vadd.f32 0.0, %v486
        %v488 = vpop.f32.mrf.mxu0
        %v489 = vadd.f32 0.0, %v488
        %v490 = vpop.f32.mrf.mxu0
        %v491 = vadd.f32 0.0, %v490
        %v492 = vpop.f32.mrf.mxu0
        %v493 = vadd.f32 0.0, %v492
        %494 = vmatprep.mubr.bf16.mxu0 0
        %495 = vmatmul.mubr.bf16.gmra.mxu0 %v295
        %v496 = vpop.f32.mrf.mxu0
        %v497 = vadd.f32 0.0, %v496
        %v498 = vpop.f32.mrf.mxu0
        %v499 = vadd.f32 0.0, %v498
        %v500 = vpop.f32.mrf.mxu0
        %v501 = vadd.f32 0.0, %v500
        %v502 = vpop.f32.mrf.mxu0
        %v503 = vadd.f32 0.0, %v502
        %504 = vdwg.mxu0
        %v505 = vmax.f32 %v427, %v431
        %v506 = vrot.slane %v505, 4
        %v507 = vmax.f32 %v505, %v506
        %v508 = vrot.slane %v507, 2
        %v509 = vmax.f32 %v507, %v508
        %v510 = vrot.slane %v509, 1
        %v511 = vmax.f32 %v509, %v510
        %v512 = vmax.f32 %v429, %v433
        %v513 = vrot.slane %v512, 4
        %v514 = vmax.f32 %v512, %v513
        %v515 = vrot.slane %v514, 2
        %v516 = vmax.f32 %v514, %v515
        %v517 = vrot.slane %v516, 1
        %v518 = vmax.f32 %v516, %v517
        %v519 = vmax.f32 %v437, %v441
        %v520 = vrot.slane %v519, 4
        %v521 = vmax.f32 %v519, %v520
        %v522 = vrot.slane %v521, 2
        %v523 = vmax.f32 %v521, %v522
        %v524 = vrot.slane %v523, 1
        %v525 = vmax.f32 %v523, %v524
        %v526 = vmax.f32 %v439, %v443
        %v527 = vrot.slane %v526, 4
        %v528 = vmax.f32 %v526, %v527
        %v529 = vrot.slane %v528, 2
        %v530 = vmax.f32 %v528, %v529
        %v531 = vrot.slane %v530, 1
        %v532 = vmax.f32 %v530, %v531
        %v533 = vmax.f32 %v447, %v451
        %v534 = vrot.slane %v533, 4
        %v535 = vmax.f32 %v533, %v534
        %v536 = vrot.slane %v535, 2
        %v537 = vmax.f32 %v535, %v536
        %v538 = vrot.slane %v537, 1
        %v539 = vmax.f32 %v537, %v538
        %v540 = vmax.f32 %v449, %v453
        %v541 = vrot.slane %v540, 4
        %v542 = vmax.f32 %v540, %v541
        %v543 = vrot.slane %v542, 2
        %v544 = vmax.f32 %v542, %v543
        %v545 = vrot.slane %v544, 1
        %v546 = vmax.f32 %v544, %v545
        %v547 = vmax.f32 %v457, %v461
        %v548 = vrot.slane %v547, 4
        %v549 = vmax.f32 %v547, %v548
        %v550 = vrot.slane %v549, 2
        %v551 = vmax.f32 %v549, %v550
        %v552 = vrot.slane %v551, 1
        %v553 = vmax.f32 %v551, %v552
        %v554 = vmax.f32 %v459, %v463
        %v555 = vrot.slane %v554, 4
        %v556 = vmax.f32 %v554, %v555
        %v557 = vrot.slane %v556, 2
        %v558 = vmax.f32 %v556, %v557
        %v559 = vrot.slane %v558, 1
        %v560 = vmax.f32 %v558, %v559
        %v561 = vmax.f32 %v467, %v471
        %v562 = vrot.slane %v561, 4
        %v563 = vmax.f32 %v561, %v562
        %v564 = vrot.slane %v563, 2
        %v565 = vmax.f32 %v563, %v564
        %v566 = vrot.slane %v565, 1
        %v567 = vmax.f32 %v565, %v566
        %v568 = vmax.f32 %v469, %v473
        %v569 = vrot.slane %v568, 4
        %v570 = vmax.f32 %v568, %v569
        %v571 = vrot.slane %v570, 2
        %v572 = vmax.f32 %v570, %v571
        %v573 = vrot.slane %v572, 1
        %v574 = vmax.f32 %v572, %v573
        %v575 = vmax.f32 %v477, %v481
        %v576 = vrot.slane %v575, 4
        %v577 = vmax.f32 %v575, %v576
        %v578 = vrot.slane %v577, 2
        %v579 = vmax.f32 %v577, %v578
        %v580 = vrot.slane %v579, 1
        %v581 = vmax.f32 %v579, %v580
        %v582 = vmax.f32 %v479, %v483
        %v583 = vrot.slane %v582, 4
        %v584 = vmax.f32 %v582, %v583
        %v585 = vrot.slane %v584, 2
        %v586 = vmax.f32 %v584, %v585
        %v587 = vrot.slane %v586, 1
        %v588 = vmax.f32 %v586, %v587
        %v589 = vmax.f32 %v487, %v491
        %v590 = vrot.slane %v589, 4
        %v591 = vmax.f32 %v589, %v590
        %v592 = vrot.slane %v591, 2
        %v593 = vmax.f32 %v591, %v592
        %v594 = vrot.slane %v593, 1
        %v595 = vmax.f32 %v593, %v594
        %v596 = vmax.f32 %v489, %v493
        %v597 = vrot.slane %v596, 4
        %v598 = vmax.f32 %v596, %v597
        %v599 = vrot.slane %v598, 2
        %v600 = vmax.f32 %v598, %v599
        %v601 = vrot.slane %v600, 1
        %v602 = vmax.f32 %v600, %v601
        %v603 = vmax.f32 %v497, %v501
        %v604 = vrot.slane %v603, 4
        %v605 = vmax.f32 %v603, %v604
        %v606 = vrot.slane %v605, 2
        %v607 = vmax.f32 %v605, %v606
        %v608 = vrot.slane %v607, 1
        %v609 = vmax.f32 %v607, %v608
        %v610 = vmax.f32 %v499, %v503
        %v611 = vrot.slane %v610, 4
        %v612 = vmax.f32 %v610, %v611
        %v613 = vrot.slane %v612, 2
        %v614 = vmax.f32 %v612, %v613
        %v615 = vrot.slane %v614, 1
        %v616 = vmax.f32 %v614, %v615
        %v617 = vsub.f32 %v427, %v511
        %v618 = vsub.f32 %v429, %v518
        %v619 = vsub.f32 %v431, %v511
        %v620 = vsub.f32 %v433, %v518
        %v621 = vsub.f32 %v437, %v525
        %v622 = vsub.f32 %v439, %v532
        %v623 = vsub.f32 %v441, %v525
        %v624 = vsub.f32 %v443, %v532
        %v625 = vsub.f32 %v447, %v539
        %v626 = vsub.f32 %v449, %v546
        %v627 = vsub.f32 %v451, %v539
        %v628 = vsub.f32 %v453, %v546
        %v629 = vsub.f32 %v457, %v553
        %v630 = vsub.f32 %v459, %v560
        %v631 = vsub.f32 %v461, %v553
        %v632 = vsub.f32 %v463, %v560
        %v633 = vsub.f32 %v467, %v567
        %v634 = vsub.f32 %v469, %v574
        %v635 = vsub.f32 %v471, %v567
        %v636 = vsub.f32 %v473, %v574
        %v637 = vsub.f32 %v477, %v581
        %v638 = vsub.f32 %v479, %v588
        %v639 = vsub.f32 %v481, %v581
        %v640 = vsub.f32 %v483, %v588
        %v641 = vsub.f32 %v487, %v595
        %v642 = vsub.f32 %v489, %v602
        %v643 = vsub.f32 %v491, %v595
        %v644 = vsub.f32 %v493, %v602
        %v645 = vsub.f32 %v497, %v609
        %v646 = vsub.f32 %v499, %v616
        %v647 = vsub.f32 %v501, %v609
        %v648 = vsub.f32 %v503, %v616
        %v649 = vmul.f32 %v617, 1.442695
        %v650 = vpow.pop %v649
        %v651 = vmul.f32 %v618, 1.442695
        %v652 = vpow.pop %v651
        %v653 = vmul.f32 %v619, 1.442695
        %v654 = vpow.pop %v653
        %v655 = vmul.f32 %v620, 1.442695
        %v656 = vpow.pop %v655
        %v657 = vmul.f32 %v621, 1.442695
        %v658 = vpow.pop %v657
        %v659 = vmul.f32 %v622, 1.442695
        %v660 = vpow.pop %v659
        %v661 = vmul.f32 %v623, 1.442695
        %v662 = vpow.pop %v661
        %v663 = vmul.f32 %v624, 1.442695
        %v664 = vpow.pop %v663
        %v665 = vmul.f32 %v625, 1.442695
        %v666 = vpow.pop %v665
        %v667 = vmul.f32 %v626, 1.442695
        %v668 = vpow.pop %v667
        %v669 = vmul.f32 %v627, 1.442695
        %v670 = vpow.pop %v669
        %v671 = vmul.f32 %v628, 1.442695
        %v672 = vpow.pop %v671
        %v673 = vmul.f32 %v629, 1.442695
        %v674 = vpow.pop %v673
        %v675 = vmul.f32 %v630, 1.442695
        %v676 = vpow.pop %v675
        %v677 = vmul.f32 %v631, 1.442695
        %v678 = vpow.pop %v677
        %v679 = vmul.f32 %v632, 1.442695
        %v680 = vpow.pop %v679
        %v681 = vmul.f32 %v633, 1.442695
        %v682 = vpow.pop %v681
        %v683 = vmul.f32 %v634, 1.442695
        %v684 = vpow.pop %v683
        %v685 = vmul.f32 %v635, 1.442695
        %v686 = vpow.pop %v685
        %v687 = vmul.f32 %v636, 1.442695
        %v688 = vpow.pop %v687
        %v689 = vmul.f32 %v637, 1.442695
        %v690 = vpow.pop %v689
        %v691 = vmul.f32 %v638, 1.442695
        %v692 = vpow.pop %v691
        %v693 = vmul.f32 %v639, 1.442695
        %v694 = vpow.pop %v693
        %v695 = vmul.f32 %v640, 1.442695
        %v696 = vpow.pop %v695
        %v697 = vmul.f32 %v641, 1.442695
        %v698 = vpow.pop %v697
        %v699 = vmul.f32 %v642, 1.442695
        %v700 = vpow.pop %v699
        %v701 = vmul.f32 %v643, 1.442695
        %v702 = vpow.pop %v701
        %v703 = vmul.f32 %v644, 1.442695
        %v704 = vpow.pop %v703
        %v705 = vmul.f32 %v645, 1.442695
        %v706 = vpow.pop %v705
        %v707 = vmul.f32 %v646, 1.442695
        %v708 = vpow.pop %v707
        %v709 = vmul.f32 %v647, 1.442695
        %v710 = vpow.pop %v709
        %v711 = vmul.f32 %v648, 1.442695
        %v712 = vpow.pop %v711
        %v713 = vadd.f32 %v650, %v654
        %v714 = vrot.slane %v713, 4
        %v715 = vadd.f32 %v713, %v714
        %v716 = vrot.slane %v715, 2
        %v717 = vadd.f32 %v715, %v716
        %v718 = vrot.slane %v717, 1
        %v719 = vadd.f32 %v717, %v718
        %v720 = vadd.f32 %v652, %v656
        %v721 = vrot.slane %v720, 4
        %v722 = vadd.f32 %v720, %v721
        %v723 = vrot.slane %v722, 2
        %v724 = vadd.f32 %v722, %v723
        %v725 = vrot.slane %v724, 1
        %v726 = vadd.f32 %v724, %v725
        %v727 = vadd.f32 %v658, %v662
        %v728 = vrot.slane %v727, 4
        %v729 = vadd.f32 %v727, %v728
        %v730 = vrot.slane %v729, 2
        %v731 = vadd.f32 %v729, %v730
        %v732 = vrot.slane %v731, 1
        %v733 = vadd.f32 %v731, %v732
        %v734 = vadd.f32 %v660, %v664
        %v735 = vrot.slane %v734, 4
        %v736 = vadd.f32 %v734, %v735
        %v737 = vrot.slane %v736, 2
        %v738 = vadd.f32 %v736, %v737
        %v739 = vrot.slane %v738, 1
        %v740 = vadd.f32 %v738, %v739
        %v741 = vadd.f32 %v666, %v670
        %v742 = vrot.slane %v741, 4
        %v743 = vadd.f32 %v741, %v742
        %v744 = vrot.slane %v743, 2
        %v745 = vadd.f32 %v743, %v744
        %v746 = vrot.slane %v745, 1
        %v747 = vadd.f32 %v745, %v746
        %v748 = vadd.f32 %v668, %v672
        %v749 = vrot.slane %v748, 4
        %v750 = vadd.f32 %v748, %v749
        %v751 = vrot.slane %v750, 2
        %v752 = vadd.f32 %v750, %v751
        %v753 = vrot.slane %v752, 1
        %v754 = vadd.f32 %v752, %v753
        %v755 = vadd.f32 %v674, %v678
        %v756 = vrot.slane %v755, 4
        %v757 = vadd.f32 %v755, %v756
        %v758 = vrot.slane %v757, 2
        %v759 = vadd.f32 %v757, %v758
        %v760 = vrot.slane %v759, 1
        %v761 = vadd.f32 %v759, %v760
        %v762 = vadd.f32 %v676, %v680
        %v763 = vrot.slane %v762, 4
        %v764 = vadd.f32 %v762, %v763
        %v765 = vrot.slane %v764, 2
        %v766 = vadd.f32 %v764, %v765
        %v767 = vrot.slane %v766, 1
        %v768 = vadd.f32 %v766, %v767
        %v769 = vadd.f32 %v682, %v686
        %v770 = vrot.slane %v769, 4
        %v771 = vadd.f32 %v769, %v770
        %v772 = vrot.slane %v771, 2
        %v773 = vadd.f32 %v771, %v772
        %v774 = vrot.slane %v773, 1
        %v775 = vadd.f32 %v773, %v774
        %v776 = vadd.f32 %v684, %v688
        %v777 = vrot.slane %v776, 4
        %v778 = vadd.f32 %v776, %v777
        %v779 = vrot.slane %v778, 2
        %v780 = vadd.f32 %v778, %v779
        %v781 = vrot.slane %v780, 1
        %v782 = vadd.f32 %v780, %v781
        %v783 = vadd.f32 %v690, %v694
        %v784 = vrot.slane %v783, 4
        %v785 = vadd.f32 %v783, %v784
        %v786 = vrot.slane %v785, 2
        %v787 = vadd.f32 %v785, %v786
        %v788 = vrot.slane %v787, 1
        %v789 = vadd.f32 %v787, %v788
        %v790 = vadd.f32 %v692, %v696
        %v791 = vrot.slane %v790, 4
        %v792 = vadd.f32 %v790, %v791
        %v793 = vrot.slane %v792, 2
        %v794 = vadd.f32 %v792, %v793
        %v795 = vrot.slane %v794, 1
        %v796 = vadd.f32 %v794, %v795
        %v797 = vadd.f32 %v698, %v702
        %v798 = vrot.slane %v797, 4
        %v799 = vadd.f32 %v797, %v798
        %v800 = vrot.slane %v799, 2
        %v801 = vadd.f32 %v799, %v800
        %v802 = vrot.slane %v801, 1
        %v803 = vadd.f32 %v801, %v802
        %v804 = vadd.f32 %v700, %v704
        %v805 = vrot.slane %v804, 4
        %v806 = vadd.f32 %v804, %v805
        %v807 = vrot.slane %v806, 2
        %v808 = vadd.f32 %v806, %v807
        %v809 = vrot.slane %v808, 1
        %v810 = vadd.f32 %v808, %v809
        %v811 = vadd.f32 %v706, %v710
        %v812 = vrot.slane %v811, 4
        %v813 = vadd.f32 %v811, %v812
        %v814 = vrot.slane %v813, 2
        %v815 = vadd.f32 %v813, %v814
        %v816 = vrot.slane %v815, 1
        %v817 = vadd.f32 %v815, %v816
        %v818 = vadd.f32 %v708, %v712
        %v819 = vrot.slane %v818, 4
        %v820 = vadd.f32 %v818, %v819
        %v821 = vrot.slane %v820, 2
        %v822 = vadd.f32 %v820, %v821
        %v823 = vrot.slane %v822, 1
        %v824 = vadd.f32 %v822, %v823
        %v825 = vrcp.pop %v719
        %v826 = vrcp.pop %v726
        %v827 = vrcp.pop %v733
        %v828 = vrcp.pop %v740
        %v829 = vrcp.pop %v747
        %v830 = vrcp.pop %v754
        %v831 = vrcp.pop %v761
        %v832 = vrcp.pop %v768
        %v833 = vrcp.pop %v775
        %v834 = vrcp.pop %v782
        %v835 = vrcp.pop %v789
        %v836 = vrcp.pop %v796
        %v837 = vrcp.pop %v803
        %v838 = vrcp.pop %v810
        %v839 = vrcp.pop %v817
        %v840 = vrcp.pop %v824
        %v841 = vmul.f32 %v650, %v825
        %v842 = vmul.f32 %v652, %v826
        %v843 = vmul.f32 %v654, %v825
        %v844 = vmul.f32 %v656, %v826
        %v845 = vmul.f32 %v658, %v827
        %v846 = vmul.f32 %v660, %v828
        %v847 = vmul.f32 %v662, %v827
        %v848 = vmul.f32 %v664, %v828
        %v849 = vmul.f32 %v666, %v829
        %v850 = vmul.f32 %v668, %v830
        %v851 = vmul.f32 %v670, %v829
        %v852 = vmul.f32 %v672, %v830
        %v853 = vmul.f32 %v674, %v831
        %v854 = vmul.f32 %v676, %v832
        %v855 = vmul.f32 %v678, %v831
        %v856 = vmul.f32 %v680, %v832
        %v857 = vmul.f32 %v682, %v833
        %v858 = vmul.f32 %v684, %v834
        %v859 = vmul.f32 %v686, %v833
        %v860 = vmul.f32 %v688, %v834
        %v861 = vmul.f32 %v690, %v835
        %v862 = vmul.f32 %v692, %v836
        %v863 = vmul.f32 %v694, %v835
        %v864 = vmul.f32 %v696, %v836
        %v865 = vmul.f32 %v698, %v837
        %v866 = vmul.f32 %v700, %v838
        %v867 = vmul.f32 %v702, %v837
        %v868 = vmul.f32 %v704, %v838
        %v869 = vmul.f32 %v706, %v839
        %v870 = vmul.f32 %v708, %v840
        %v871 = vmul.f32 %v710, %v839
        %v872 = vmul.f32 %v712, %v840
        %v873 = vpack.c.bf16 %v843, %v841
        %v874 = vpack.c.bf16 %v844, %v842
        %v875 = vpack.c.bf16 %v847, %v845
        %v876 = vpack.c.bf16 %v848, %v846
        %v877 = vpack.c.bf16 %v851, %v849
        %v878 = vpack.c.bf16 %v852, %v850
        %v879 = vpack.c.bf16 %v855, %v853
        %v880 = vpack.c.bf16 %v856, %v854
        %v881 = vpack.c.bf16 %v859, %v857
        %v882 = vpack.c.bf16 %v860, %v858
        %v883 = vpack.c.bf16 %v863, %v861
        %v884 = vpack.c.bf16 %v864, %v862
        %v885 = vpack.c.bf16 %v867, %v865
        %v886 = vpack.c.bf16 %v868, %v866
        %v887 = vpack.c.bf16 %v871, %v869
        %v888 = vpack.c.bf16 %v872, %v870
        %v889 = vld [vmem:[#allocation2] sm:$0xff]
        %v890 = vld [vmem:[#allocation2 + $0x8] sm:$0xff]
        %v891 = vld [vmem:[#allocation2 + $0x10] sm:$0xff]
        %v892 = vld [vmem:[#allocation2 + $0x18] sm:$0xff]
        %v893 = vld [vmem:[#allocation2 + $0x20] sm:$0xff]
        %v894 = vld [vmem:[#allocation2 + $0x28] sm:$0xff]
        %v895 = vld [vmem:[#allocation2 + $0x30] sm:$0xff]
        %v896 = vld [vmem:[#allocation2 + $0x38] sm:$0xff]
        %v897 = vld [vmem:[#allocation2 + $0x40] sm:$0xff]
        %v898 = vld [vmem:[#allocation2 + $0x48] sm:$0xff]
        %v899 = vld [vmem:[#allocation2 + $0x50] sm:$0xff]
        %v900 = vld [vmem:[#allocation2 + $0x58] sm:$0xff]
        %v901 = vld [vmem:[#allocation2 + $0x60] sm:$0xff]
        %v902 = vld [vmem:[#allocation2 + $0x68] sm:$0xff]
        %v903 = vld [vmem:[#allocation2 + $0x70] sm:$0xff]
        %v904 = vld [vmem:[#allocation2 + $0x78] sm:$0xff]
        %v905 = vld [vmem:[#allocation8] sm:$0xf]
        %v906 = vld [vmem:[#allocation8 + $0x4] sm:$0xf]
        %v907 = vld [vmem:[#allocation8 + $0x8] sm:$0xf]
        %v908 = vld [vmem:[#allocation8 + $0xc] sm:$0xf]
        %v909 = vld [vmem:[#allocation8 + $0x10] sm:$0xf]
        %v910 = vld [vmem:[#allocation8 + $0x14] sm:$0xf]
        %v911 = vld [vmem:[#allocation8 + $0x18] sm:$0xf]
        %v912 = vld [vmem:[#allocation8 + $0x1c] sm:$0xf]
        %v913 = vld [vmem:[#allocation8 + $0x20] sm:$0xf]
        %v914 = vld [vmem:[#allocation8 + $0x24] sm:$0xf]
        %v915 = vld [vmem:[#allocation8 + $0x28] sm:$0xf]
        %v916 = vld [vmem:[#allocation8 + $0x2c] sm:$0xf]
        %v917 = vld [vmem:[#allocation8 + $0x30] sm:$0xf]
        %v918 = vld [vmem:[#allocation8 + $0x34] sm:$0xf]
        %v919 = vld [vmem:[#allocation8 + $0x38] sm:$0xf]
        %v920 = vld [vmem:[#allocation8 + $0x3c] sm:$0xf]
        %v921 = vld [vmem:[#allocation8 + $0x40] sm:$0xf]
        %v922 = vld [vmem:[#allocation8 + $0x44] sm:$0xf]
        %v923 = vld [vmem:[#allocation8 + $0x48] sm:$0xf]
        %v924 = vld [vmem:[#allocation8 + $0x4c] sm:$0xf]
        %v925 = vld [vmem:[#allocation8 + $0x50] sm:$0xf]
        %v926 = vld [vmem:[#allocation8 + $0x54] sm:$0xf]
        %v927 = vld [vmem:[#allocation8 + $0x58] sm:$0xf]
        %v928 = vld [vmem:[#allocation8 + $0x5c] sm:$0xf]
        %v929 = vld [vmem:[#allocation8 + $0x60] sm:$0xf]
        %v930 = vld [vmem:[#allocation8 + $0x64] sm:$0xf]
        %v931 = vld [vmem:[#allocation8 + $0x68] sm:$0xf]
        %v932 = vld [vmem:[#allocation8 + $0x6c] sm:$0xf]
        %v933 = vld [vmem:[#allocation8 + $0x70] sm:$0xf]
        %v934 = vld [vmem:[#allocation8 + $0x74] sm:$0xf]
        %v935 = vld [vmem:[#allocation8 + $0x78] sm:$0xf]
        %v936 = vld [vmem:[#allocation8 + $0x7c] sm:$0xf]
        %v969 = vunpack.c.l.b16 %v905
        %v970 = vunpack.c.l.b16 %v906
        %v971 = vunpack.c.l.b16 %v907
        %v972 = vunpack.c.l.b16 %v908
        %v973 = vunpack.c.l.b16 %v909
        %v974 = vunpack.c.l.b16 %v910
        %v975 = vunpack.c.l.b16 %v911
        %v976 = vunpack.c.l.b16 %v912
        %v977 = vunpack.c.l.b16 %v913
        %v978 = vunpack.c.l.b16 %v914
        %v979 = vunpack.c.l.b16 %v915
        %v980 = vunpack.c.l.b16 %v916
        %v981 = vunpack.c.l.b16 %v917
        %v982 = vunpack.c.l.b16 %v918
        %v983 = vunpack.c.l.b16 %v919
        %v984 = vunpack.c.l.b16 %v920
        %v985 = vunpack.c.l.b16 %v921
        %v986 = vunpack.c.l.b16 %v922
        %v987 = vunpack.c.l.b16 %v923
        %v988 = vunpack.c.l.b16 %v924
        %v989 = vunpack.c.l.b16 %v925
        %v990 = vunpack.c.l.b16 %v926
        %v991 = vunpack.c.l.b16 %v927
        %v992 = vunpack.c.l.b16 %v928
        %v993 = vunpack.c.l.b16 %v929
        %v994 = vunpack.c.l.b16 %v930
        %v995 = vunpack.c.l.b16 %v931
        %v996 = vunpack.c.l.b16 %v932
        %v997 = vunpack.c.l.b16 %v933
        %v998 = vunpack.c.l.b16 %v934
        %v999 = vunpack.c.l.b16 %v935
        %v1000 = vunpack.c.l.b16 %v936
        %v1001 = vpack.c.b16 %v970, %v969
        %v1002 = vpack.c.b16 %v972, %v971
        %v1003 = vpack.c.b16 %v974, %v973
        %v1004 = vpack.c.b16 %v976, %v975
        %v1005 = vpack.c.b16 %v978, %v977
        %v1006 = vpack.c.b16 %v980, %v979
        %v1007 = vpack.c.b16 %v982, %v981
        %v1008 = vpack.c.b16 %v984, %v983
        %v1009 = vpack.c.b16 %v986, %v985
        %v1010 = vpack.c.b16 %v988, %v987
        %v1011 = vpack.c.b16 %v990, %v989
        %v1012 = vpack.c.b16 %v992, %v991
        %v1013 = vpack.c.b16 %v994, %v993
        %v1014 = vpack.c.b16 %v996, %v995
        %v1015 = vpack.c.b16 %v998, %v997
        %v1016 = vpack.c.b16 %v1000, %v999
        %1033 = vmatprep.subr.bf16.mxu0 0
        %1034 = vmatpush1.bf16.msra.mxu0 %v1008
        %1035 = vmatprep.subr.bf16.mxu0 0
        %1036 = vmatpush1.bf16.msra.mxu0 %v1007
        %1037 = vmatprep.subr.bf16.mxu0 0
        %1038 = vmatpush1.bf16.msra.mxu0 %v1006
        %1039 = vmatprep.subr.bf16.mxu0 0
        %1040 = vmatpush1.bf16.msra.mxu0 %v1005
        %1041 = vmatprep.subr.bf16.mxu0 0
        %1042 = vmatpush1.bf16.msra.mxu0 %v1004
        %1043 = vmatprep.subr.bf16.mxu0 0
        %1044 = vmatpush1.bf16.msra.mxu0 %v1003
        %1045 = vmatprep.subr.bf16.mxu0 0
        %1046 = vmatpush1.bf16.msra.mxu0 %v1002
        %1047 = vmatprep.subr.bf16.mxu0 0
        %1048 = vmatpush1.bf16.msra.mxu0 %v1001
        %1049 = vmatprep.subr.bf16.mxu0 0
        %1050 = vmatpush2.bf16.msra.mxu0 %v1016
        %1051 = vmatprep.subr.bf16.mxu0 0
        %1052 = vmatpush2.bf16.msra.mxu0 %v1015
        %1053 = vmatprep.subr.bf16.mxu0 0
        %1054 = vmatpush2.bf16.msra.mxu0 %v1014
        %1055 = vmatprep.subr.bf16.mxu0 0
        %1056 = vmatpush2.bf16.msra.mxu0 %v1013
        %1057 = vmatprep.subr.bf16.mxu0 0
        %1058 = vmatpush2.bf16.msra.mxu0 %v1012
        %1059 = vmatprep.subr.bf16.mxu0 0
        %1060 = vmatpush2.bf16.msra.mxu0 %v1011
        %1061 = vmatprep.subr.bf16.mxu0 0
        %1062 = vmatpush2.bf16.msra.mxu0 %v1010
        %1063 = vmatprep.subr.bf16.mxu0 0
        %1064 = vmatpush2.bf16.msra.mxu0 %v1009
        %1065 = vmatprep.mubr.bf16.mxu0 %v874
        %1066 = vmatmul.mubr.bf16.gmra.mxu0 %v873
        %v1067 = vpop.f32.mrf.mxu0
        %v1068 = vadd.f32 0.0, %v1067
        %v1069 = vpop.f32.mrf.mxu0
        %v1070 = vpop.f32.mrf.mxu0
        %v1071 = vadd.f32 0.0, %v1070
        %v1072 = vpop.f32.mrf.mxu0
        %1073 = vmatprep.mubr.bf16.mxu0 %v876
        %1074 = vmatmul.mubr.bf16.gmra.mxu0 %v875
        %v1075 = vpop.f32.mrf.mxu0
        %v1076 = vadd.f32 0.0, %v1075
        %v1077 = vpop.f32.mrf.mxu0
        %v1078 = vpop.f32.mrf.mxu0
        %v1079 = vadd.f32 0.0, %v1078
        %v1080 = vpop.f32.mrf.mxu0
        %1081 = vmatprep.mubr.bf16.mxu0 %v878
        %1082 = vmatmul.mubr.bf16.gmra.mxu0 %v877
        %v1083 = vpop.f32.mrf.mxu0
        %v1084 = vadd.f32 0.0, %v1083
        %v1085 = vpop.f32.mrf.mxu0
        %v1086 = vpop.f32.mrf.mxu0
        %v1087 = vadd.f32 0.0, %v1086
        %v1088 = vpop.f32.mrf.mxu0
        %1089 = vmatprep.mubr.bf16.mxu0 %v880
        %1090 = vmatmul.mubr.bf16.gmra.mxu0 %v879
        %v1091 = vpop.f32.mrf.mxu0
        %v1092 = vadd.f32 0.0, %v1091
        %v1093 = vpop.f32.mrf.mxu0
        %v1094 = vpop.f32.mrf.mxu0
        %v1095 = vadd.f32 0.0, %v1094
        %v1096 = vpop.f32.mrf.mxu0
        %1097 = vmatprep.mubr.bf16.mxu0 %v882
        %1098 = vmatmul.mubr.bf16.gmra.mxu0 %v881
        %v1099 = vpop.f32.mrf.mxu0
        %v1100 = vadd.f32 0.0, %v1099
        %v1101 = vpop.f32.mrf.mxu0
        %v1102 = vpop.f32.mrf.mxu0
        %v1103 = vadd.f32 0.0, %v1102
        %v1104 = vpop.f32.mrf.mxu0
        %1105 = vmatprep.mubr.bf16.mxu0 %v884
        %1106 = vmatmul.mubr.bf16.gmra.mxu0 %v883
        %v1107 = vpop.f32.mrf.mxu0
        %v1108 = vadd.f32 0.0, %v1107
        %v1109 = vpop.f32.mrf.mxu0
        %v1110 = vpop.f32.mrf.mxu0
        %v1111 = vadd.f32 0.0, %v1110
        %v1112 = vpop.f32.mrf.mxu0
        %1113 = vmatprep.mubr.bf16.mxu0 %v886
        %1114 = vmatmul.mubr.bf16.gmra.mxu0 %v885
        %v1115 = vpop.f32.mrf.mxu0
        %v1116 = vadd.f32 0.0, %v1115
        %v1117 = vpop.f32.mrf.mxu0
        %v1118 = vpop.f32.mrf.mxu0
        %v1119 = vadd.f32 0.0, %v1118
        %v1120 = vpop.f32.mrf.mxu0
        %1121 = vmatprep.mubr.bf16.mxu0 %v888
        %1122 = vmatmul.mubr.bf16.gmra.mxu0 %v887
        %v1123 = vpop.f32.mrf.mxu0
        %v1124 = vadd.f32 0.0, %v1123
        %v1125 = vpop.f32.mrf.mxu0
        %v1126 = vpop.f32.mrf.mxu0
        %v1127 = vadd.f32 0.0, %v1126
        %v1128 = vpop.f32.mrf.mxu0
        %1129 = vdwg.mxu0
        %v1130 = vadd.f32 %v889, %v1068
        %v1131 = vadd.f32 %v890, %v1071
        %v1132 = vadd.f32 %v891, %v1076
        %v1133 = vadd.f32 %v892, %v1079
        %v1134 = vadd.f32 %v893, %v1084
        %v1135 = vadd.f32 %v894, %v1087
        %v1136 = vadd.f32 %v895, %v1092
        %v1137 = vadd.f32 %v896, %v1095
        %v1138 = vadd.f32 %v897, %v1100
        %v1139 = vadd.f32 %v898, %v1103
        %v1140 = vadd.f32 %v899, %v1108
        %v1141 = vadd.f32 %v900, %v1111
        %v1142 = vadd.f32 %v901, %v1116
        %v1143 = vadd.f32 %v902, %v1119
        %v1144 = vadd.f32 %v903, %v1124
        %v1145 = vadd.f32 %v904, %v1127
        %1146 = vst [vmem:[#allocation2] sm:$0xff] %v1130
        %1147 = vst [vmem:[#allocation2 + $0x8] sm:$0xff] %v1131
        %1148 = vst [vmem:[#allocation2 + $0x10] sm:$0xff] %v1132
        %1149 = vst [vmem:[#allocation2 + $0x18] sm:$0xff] %v1133
        %1150 = vst [vmem:[#allocation2 + $0x20] sm:$0xff] %v1134
        %1151 = vst [vmem:[#allocation2 + $0x28] sm:$0xff] %v1135
        %1152 = vst [vmem:[#allocation2 + $0x30] sm:$0xff] %v1136
        %1153 = vst [vmem:[#allocation2 + $0x38] sm:$0xff] %v1137
        %1154 = vst [vmem:[#allocation2 + $0x40] sm:$0xff] %v1138
        %1155 = vst [vmem:[#allocation2 + $0x48] sm:$0xff] %v1139
        %1156 = vst [vmem:[#allocation2 + $0x50] sm:$0xff] %v1140
        %1157 = vst [vmem:[#allocation2 + $0x58] sm:$0xff] %v1141
        %1158 = vst [vmem:[#allocation2 + $0x60] sm:$0xff] %v1142
        %1159 = vst [vmem:[#allocation2 + $0x68] sm:$0xff] %v1143
        %1160 = vst [vmem:[#allocation2 + $0x70] sm:$0xff] %v1144
        %1161 = vst [vmem:[#allocation2 + $0x78] sm:$0xff] %v1145
        // Predicated region
        $region49: #{tpu_custom_call.1} parent=31 // pred_check
          %p1162 = pneg %p252
        $region50: #{tpu_custom_call.1} parent=31 // pred_check_branch
          %1164 = sbr.rel (%p1162) target = $region52
        $region51: #{tpu_custom_call.1} parent=31 // pred_region
          %v1165 = vld [vmem:[#allocation2] sm:$0xff]
          %v1166 = vld [vmem:[#allocation2 + $0x8] sm:$0xff]
          %v1167 = vld [vmem:[#allocation2 + $0x10] sm:$0xff]
          %v1168 = vld [vmem:[#allocation2 + $0x18] sm:$0xff]
          %v1169 = vld [vmem:[#allocation2 + $0x20] sm:$0xff]
          %v1170 = vld [vmem:[#allocation2 + $0x28] sm:$0xff]
          %v1171 = vld [vmem:[#allocation2 + $0x30] sm:$0xff]
          %v1172 = vld [vmem:[#allocation2 + $0x38] sm:$0xff]
          %v1173 = vld [vmem:[#allocation2 + $0x40] sm:$0xff]
          %v1174 = vld [vmem:[#allocation2 + $0x48] sm:$0xff]
          %v1175 = vld [vmem:[#allocation2 + $0x50] sm:$0xff]
          %v1176 = vld [vmem:[#allocation2 + $0x58] sm:$0xff]
          %v1177 = vld [vmem:[#allocation2 + $0x60] sm:$0xff]
          %v1178 = vld [vmem:[#allocation2 + $0x68] sm:$0xff]
          %v1179 = vld [vmem:[#allocation2 + $0x70] sm:$0xff]
          %v1180 = vld [vmem:[#allocation2 + $0x78] sm:$0xff]
          %1181 = vst [vmem:[%s246] sm:$0xff] %v1165
          %1182 = vst [vmem:[%s246 + $0x8] sm:$0xff] %v1166
          %1183 = vst [vmem:[%s246 + $0x10] sm:$0xff] %v1167
          %1184 = vst [vmem:[%s246 + $0x18] sm:$0xff] %v1168
          %1185 = vst [vmem:[%s246 + $0x20] sm:$0xff] %v1169
          %1186 = vst [vmem:[%s246 + $0x28] sm:$0xff] %v1170
          %1187 = vst [vmem:[%s246 + $0x30] sm:$0xff] %v1171
          %1188 = vst [vmem:[%s246 + $0x38] sm:$0xff] %v1172
          %1189 = vst [vmem:[%s246 + $0x40] sm:$0xff] %v1173
          %1190 = vst [vmem:[%s246 + $0x48] sm:$0xff] %v1174
          %1191 = vst [vmem:[%s246 + $0x50] sm:$0xff] %v1175
          %1192 = vst [vmem:[%s246 + $0x58] sm:$0xff] %v1176
          %1193 = vst [vmem:[%s246 + $0x60] sm:$0xff] %v1177
          %1194 = vst [vmem:[%s246 + $0x68] sm:$0xff] %v1178
          %1195 = vst [vmem:[%s246 + $0x70] sm:$0xff] %v1179
          %1196 = vst [vmem:[%s246 + $0x78] sm:$0xff] %v1180
        $region52: #{tpu_custom_call.1} parent=31 // pred_fallthru
          _
        %s1197 = sand.u32 %s119, 1
        %s1198 = scalar_lea.sflag [#allocation5], %s1197
        %s1199 = sand.u32 %s119, 1
        %s1200 = smul.addr %s1199, 128
        %s1201 = scalar_lea.vmem [#allocation9], %s1200
        // Predicated region
        $region53: #{tpu_custom_call.1} parent=31 // pred_check
          %p1202 = pneg %p129
        $region54: #{tpu_custom_call.1} parent=31 // pred_check_branch
          %1204 = sbr.rel (%p1202) target = $region56
        $region55: #{tpu_custom_call.1} parent=31 // pred_region
          %s1205 = smul.u32 8, %s25
          %s1207 = ssub.s32 2048, 2048
          %1208 = vsyncadd %s1198, %s1207
          %s1209 = smul.addr %s1205, 2
          %s1210 = smul.addr %s1209, 128
          %s1211 = scalar_lea.hbm %s3, %s1210
          %s1212 = sshll.u32 %s1201, 4
          %s1213 = int_to_ptr.vmem [resolvable:$true] %s1212
          %1218 = dma.vmem_to_hbm [thread:$0]  %s1213, 2048, %s1211, %s1198, 128, 128, 8
        $region56: #{tpu_custom_call.1} parent=31 // pred_fallthru
          _
      $region32: #{tpu_custom_call.1} parent=5 // pred_fallthru
        _
      %p1219 = scmp.le.s32.totalorder 2, %s16
      // Predicated region
      $region57: #{tpu_custom_call.1} parent=5 // pred_check
        %p1220 = pneg %p1219
      $region58: #{tpu_custom_call.1} parent=5 // pred_check_branch
        %1222 = sbr.rel (%p1220) target = $region60
      $region59: #{tpu_custom_call.1} parent=5 // pred_region
        %s1223 = ssub.s32 %s16, 2
        // Predicated region
        $region61: #{tpu_custom_call.1} parent=59 // pred_check
          %p1224 = pneg %p135
        $region62: #{tpu_custom_call.1} parent=59 // pred_check_branch
          %1226 = sbr.rel (%p1224) target = $region64
        $region63: #{tpu_custom_call.1} parent=59 // pred_region
          %s1227 = sand.u32 %s120, 1
          %s1228 = scalar_lea.sflag [#allocation5], %s1227
          %s1229 = sand.u32 %s120, 1
          %s1230 = smul.addr %s1229, 128
          %s1231 = scalar_lea.vmem [#allocation9], %s1230
          %1232 = dma.done %s1228, 2048
        $region64: #{tpu_custom_call.1} parent=59 // pred_fallthru
          _
      $region60: #{tpu_custom_call.1} parent=5 // pred_fallthru
        _
    $region6: #{tpu_custom_call.1} parent=1 // loop_footer
      %s20 = sadd.s32 1, %s16
    $region7: #{tpu_custom_call.1} parent=1 // loop_footer_branch
      %15 = sbr.rel target = $region3
    $region8: #{tpu_custom_call.1} parent=1 // loop_exit
      _
    %1233 = vsyncpa [#allocation4], 1
    %s1234 = scalar_lea.sflag [#allocation4], 1
    %1235 = vsyncpa %s1234, 1
    %1236 = vsyncpa [#allocation7], 1
    %1237 = vsyncpa [#allocation5], 1
    %s1238 = scalar_lea.sflag [#allocation5], 1
    %1239 = vsyncpa %s1238, 1

</llo_original>
